<compile_context>
chip_gen: v5e
topology: v5e:2x2
jax: 0.10.0
libtpu: 0.0.40
codegen_flags: <defaults>
</compile_context>

<pallas_src>
import functools

import jax
import jax.numpy as jnp
from jax.experimental import pallas as pl
from jax.experimental.pallas import tpu as pltpu


def _mlp_kernel(x_ref, wi_ref, bi_ref, wh_ref, bh_ref, wo_ref, bo_ref, o_ref,
                *, layer_num):
    """Whole forward pass for one batch tile, entirely in VMEM (feature-major layout).

    x_ref : (C_in, TB)     wi_ref : (H, C_in)   bi_ref : (H, 1)
    wh_ref: (H, H)         bh_ref : (H, 1)
    wo_ref: (C_out, H)     bo_ref : (C_out, 1)  o_ref  : (C_out, TB)
    """
    tb = x_ref.shape[-1]

    # init_layer:  h = W_i @ x + b_i     -> (H, TB)
    h = jnp.dot(wi_ref[...], x_ref[...],
                preferred_element_type=jnp.float32) + bi_ref[...]

    # (layer_num - 2) applications of the SAME hidden layer (shared weights),
    # exactly as in the PyTorch forward loop.  No nonlinearity between them.
    # Trip count is a small static Python int -> fully unroll so the scheduler
    # can interleave MXU pushes / bias adds across iterations.  Hoist the
    # weight load and the bias lane-broadcast (JAX does not CSE broadcast_in_dim).
    wh = wh_ref[...]                                        # (H, H)
    bh = jnp.broadcast_to(bh_ref[...], (wh.shape[0], tb))   # (H, TB)
    for _ in range(layer_num - 2):
        h = jnp.dot(wh, h, preferred_element_type=jnp.float32) + bh

    # output_layer + sigmoid -> lane-dense (C_out, TB) store.
    out = jnp.dot(wo_ref[...], h,
                  preferred_element_type=jnp.float32) + bo_ref[...]
    o_ref[...] = jax.nn.sigmoid(out).astype(o_ref.dtype)


def linear_model_forward(x, wi, bi, wh, bh, wo, bo, *, layer_num, tile_b=256):
    """Forward pass.

    x : (B, C_in) float32
    wi: (H, C_in)   bi: (H, 1)       (PyTorch nn.Linear layout: weight is (out, in))
    wh: (H, H)      bh: (H, 1)
    wo: (C_out, H)  bo: (C_out, 1)
    Returns (B, C_out) float32.
    """
    B, c_in = x.shape
    H = wi.shape[0]
    c_out = wo.shape[0]
    assert tile_b % 128 == 0, "tile_b must be a multiple of 128 (lane width)"

    # Feature-major activations: batch on lanes. Pad batch to a multiple of tile_b.
    x_t = x.T                                   # (C_in, B)
    pad = (-B) % tile_b
    if pad:
        x_t = jnp.pad(x_t, ((0, 0), (0, pad)))
    bp = B + pad

    kernel = functools.partial(_mlp_kernel, layer_num=layer_num)
    grid = (bp // tile_b,)

    out_t = pl.pallas_call(
        kernel,
        out_shape=jax.ShapeDtypeStruct((c_out, bp), jnp.float32),
        grid_spec=pltpu.PrefetchScalarGridSpec(
            num_scalar_prefetch=0,
            grid=grid,
            in_specs=[
                pl.BlockSpec((c_in, tile_b), lambda i: (0, i)),   # x^T tile (lane-dense)
                pl.BlockSpec((H, c_in), lambda i: (0, 0)),        # W_init   (resident)
                pl.BlockSpec((H, 1), lambda i: (0, 0)),           # b_init
                pl.BlockSpec((H, H), lambda i: (0, 0)),           # W_hidden
                pl.BlockSpec((H, 1), lambda i: (0, 0)),           # b_hidden
                pl.BlockSpec((c_out, H), lambda i: (0, 0)),       # W_out
                pl.BlockSpec((c_out, 1), lambda i: (0, 0)),       # b_out
            ],
            out_specs=pl.BlockSpec((c_out, tile_b), lambda i: (0, i)),  # lane-dense store
        ),
        compiler_params=pltpu.CompilerParams(
            dimension_semantics=("parallel",)),
    )(x_t, wi, bi, wh, bh, wo, bo)

    return out_t[:, :B].T                        # back to (B, C_out)


def _init_linear_params(key, fan_in, fan_out):
    """Deterministic init mimicking nn.Linear's uniform(-1/sqrt(fan_in), 1/sqrt(fan_in)).
    Returns W of shape (fan_out, fan_in) (PyTorch layout) and b of shape (fan_out, 1)."""
    kw, kb = jax.random.split(key)
    bound = 1.0 / jnp.sqrt(jnp.float32(fan_in))
    w = jax.random.uniform(kw, (fan_out, fan_in), jnp.float32, -bound, bound)
    b = jax.random.uniform(kb, (fan_out, 1), jnp.float32, -bound, bound)
    return w, b


def reference_forward(x, wi, bi, wh, bh, wo, bo, layer_num):
    h = x @ wi.T + bi[:, 0]
    for _ in range(layer_num - 2):
        h = h @ wh.T + bh[:, 0]
    return jax.nn.sigmoid(h @ wo.T + bo[:, 0])


if __name__ == "__main__":
    # Shapes consistent with the module:
    #   args.layer_num = 4, args.hidden_states = 32, input_channel = 16, output_channel = 1
    layer_num = 4
    hidden_states = 32
    input_channel = 16
    output_channel = 1
    batch = 512          # 2 grid steps at tile_b=256 -> both v7x TensorCores get work
    tile_b = 256

    key = jax.random.PRNGKey(0)
    k_x, k_init, k_hid, k_out = jax.random.split(key, 4)

    x = jax.random.normal(k_x, (batch, input_channel), jnp.float32)

    wi, bi = _init_linear_params(k_init, input_channel, hidden_states)
    wh, bh = _init_linear_params(k_hid, hidden_states, hidden_states)
    wo, bo = _init_linear_params(k_out, hidden_states, output_channel)

    y = linear_model_forward(x, wi, bi, wh, bh, wo, bo,
                             layer_num=layer_num, tile_b=tile_b)
    y = jax.block_until_ready(y)

    y_ref = reference_forward(x, wi, bi, wh, bh, wo, bo, layer_num)
    assert y.shape == (batch, output_channel)
    assert jnp.allclose(y, y_ref, atol=1e-5, rtol=1e-5)

    print("KERNEL_OK")
</pallas_src>

<mosaic_0001>
module attributes {stable_mosaic.version = 11 : i64} {
  func.func @_mlp_kernel(%arg0: i32, %arg1: memref<16x256xf32, #tpu.memory_space<vmem>>, %arg2: memref<32x16xf32, #tpu.memory_space<vmem>>, %arg3: memref<32x1xf32, #tpu.memory_space<vmem>>, %arg4: memref<32x32xf32, #tpu.memory_space<vmem>>, %arg5: memref<32x1xf32, #tpu.memory_space<vmem>>, %arg6: memref<1x32xf32, #tpu.memory_space<vmem>>, %arg7: memref<1x1xf32, #tpu.memory_space<vmem>>, %arg8: memref<1x256xf32, #tpu.memory_space<vmem>>) attributes {dimension_semantics = [#tpu.dimension_semantics<parallel>], iteration_bounds = array<i64: 2>, scalar_prefetch = 0 : i64, scratch_operands = 0 : i64, tpu.core_type = #tpu.core_type<tc>, window_params = [{transform_indices = @transform_0, window_bounds = array<i64: 16, 256>}, {pipeline_mode = #tpu.pipeline_mode<synchronous>, transform_indices = @transform_1, window_bounds = array<i64: 32, 16>}, {pipeline_mode = #tpu.pipeline_mode<synchronous>, transform_indices = @transform_2, window_bounds = array<i64: 32, 1>}, {pipeline_mode = #tpu.pipeline_mode<synchronous>, transform_indices = @transform_3, window_bounds = array<i64: 32, 32>}, {pipeline_mode = #tpu.pipeline_mode<synchronous>, transform_indices = @transform_4, window_bounds = array<i64: 32, 1>}, {pipeline_mode = #tpu.pipeline_mode<synchronous>, transform_indices = @transform_5, window_bounds = array<i64: 1, 32>}, {pipeline_mode = #tpu.pipeline_mode<synchronous>, transform_indices = @transform_6, window_bounds = array<i64: 1, 1>}, {transform_indices = @transform_7, window_bounds = array<i64: 1, 256>}]} {
    %c0 = arith.constant 0 : index
    %c0_0 = arith.constant 0 : index
    %0 = vector.load %arg2[%c0, %c0_0] : memref<32x16xf32, #tpu.memory_space<vmem>>, vector<32x16xf32>
    %c0_1 = arith.constant 0 : index
    %c0_2 = arith.constant 0 : index
    %1 = vector.load %arg1[%c0_1, %c0_2] : memref<16x256xf32, #tpu.memory_space<vmem>>, vector<16x256xf32>
    %cst = arith.constant dense<0.000000e+00> : vector<32x256xf32>
    %2 = tpu.matmul %0, %1, %cst {dimension_numbers = #tpu.dot_dimension_numbers<[1], [0], [0], [1], [0, 0, 1, 1], [], []>} : vector<32x16xf32>, vector<16x256xf32>, vector<32x256xf32> -> vector<32x256xf32>
    %c0_3 = arith.constant 0 : index
    %c0_4 = arith.constant 0 : index
    %3 = vector.load %arg3[%c0_3, %c0_4] : memref<32x1xf32, #tpu.memory_space<vmem>>, vector<32x1xf32>
    %4 = vector.broadcast %3 : vector<32x1xf32> to vector<32x256xf32>
    %5 = arith.addf %2, %4 : vector<32x256xf32>
    %c0_5 = arith.constant 0 : index
    %c0_6 = arith.constant 0 : index
    %6 = vector.load %arg4[%c0_5, %c0_6] : memref<32x32xf32, #tpu.memory_space<vmem>>, vector<32x32xf32>
    %c0_7 = arith.constant 0 : index
    %c0_8 = arith.constant 0 : index
    %7 = vector.load %arg5[%c0_7, %c0_8] : memref<32x1xf32, #tpu.memory_space<vmem>>, vector<32x1xf32>
    %8 = vector.shape_cast %7 : vector<32x1xf32> to vector<32x1xf32>
    %9 = vector.broadcast %8 : vector<32x1xf32> to vector<32x256xf32>
    %cst_9 = arith.constant dense<0.000000e+00> : vector<32x256xf32>
    %10 = tpu.matmul %6, %5, %cst_9 {dimension_numbers = #tpu.dot_dimension_numbers<[1], [0], [0], [1], [0, 0, 1, 1], [], []>} : vector<32x32xf32>, vector<32x256xf32>, vector<32x256xf32> -> vector<32x256xf32>
    %11 = arith.addf %10, %9 : vector<32x256xf32>
    %cst_10 = arith.constant dense<0.000000e+00> : vector<32x256xf32>
    %12 = tpu.matmul %6, %11, %cst_10 {dimension_numbers = #tpu.dot_dimension_numbers<[1], [0], [0], [1], [0, 0, 1, 1], [], []>} : vector<32x32xf32>, vector<32x256xf32>, vector<32x256xf32> -> vector<32x256xf32>
    %13 = arith.addf %12, %9 : vector<32x256xf32>
    %c0_11 = arith.constant 0 : index
    %c0_12 = arith.constant 0 : index
    %14 = vector.load %arg6[%c0_11, %c0_12] : memref<1x32xf32, #tpu.memory_space<vmem>>, vector<1x32xf32>
    %cst_13 = arith.constant dense<0.000000e+00> : vector<1x256xf32>
    %15 = tpu.matmul %14, %13, %cst_13 {dimension_numbers = #tpu.dot_dimension_numbers<[1], [0], [0], [1], [0, 0, 1, 1], [], []>} : vector<1x32xf32>, vector<32x256xf32>, vector<1x256xf32> -> vector<1x256xf32>
    %c0_14 = arith.constant 0 : index
    %c0_15 = arith.constant 0 : index
    %16 = vector.load %arg7[%c0_14, %c0_15] : memref<1x1xf32, #tpu.memory_space<vmem>>, vector<1x1xf32>
    %17 = vector.broadcast %16 : vector<1x1xf32> to vector<1x256xf32>
    %18 = arith.addf %15, %17 : vector<1x256xf32>
    %19 = arith.negf %18 : vector<1x256xf32>
    %20 = math.exp %19 : vector<1x256xf32>
    %cst_16 = arith.constant 1.000000e+00 : f32
    %21 = vector.broadcast %cst_16 : f32 to vector<1x256xf32>
    %22 = arith.addf %21, %20 : vector<1x256xf32>
    %23 = arith.divf %21, %22 : vector<1x256xf32>
    %c0_17 = arith.constant 0 : index
    %c0_18 = arith.constant 0 : index
    %24 = vector.load %arg8[%c0_17, %c0_18] : memref<1x256xf32, #tpu.memory_space<vmem>>, vector<1x256xf32>
    tpu.vector_store %arg8[%c0_17, %c0_18], %23 {strides = array<i32>} : memref<1x256xf32, #tpu.memory_space<vmem>>, vector<1x256xf32>,
    return
  }
  func.func @transform_0(%arg0: i32) -> (i32, i32) {
    %c0_i32 = arith.constant 0 : i32
    %c0_i32_0 = arith.constant 0 : i32
    return %c0_i32, %arg0 : i32, i32
  }
  func.func @transform_1(%arg0: i32) -> (i32, i32) {
    %c0_i32 = arith.constant 0 : i32
    %c0_i32_0 = arith.constant 0 : i32
    %c0_i32_1 = arith.constant 0 : i32
    return %c0_i32, %c0_i32_0 : i32, i32
  }
  func.func @transform_2(%arg0: i32) -> (i32, i32) {
    %c0_i32 = arith.constant 0 : i32
    %c0_i32_0 = arith.constant 0 : i32
    %c0_i32_1 = arith.constant 0 : i32
    return %c0_i32, %c0_i32_0 : i32, i32
  }
  func.func @transform_3(%arg0: i32) -> (i32, i32) {
    %c0_i32 = arith.constant 0 : i32
    %c0_i32_0 = arith.constant 0 : i32
    %c0_i32_1 = arith.constant 0 : i32
    return %c0_i32, %c0_i32_0 : i32, i32
  }
  func.func @transform_4(%arg0: i32) -> (i32, i32) {
    %c0_i32 = arith.constant 0 : i32
    %c0_i32_0 = arith.constant 0 : i32
    %c0_i32_1 = arith.constant 0 : i32
    return %c0_i32, %c0_i32_0 : i32, i32
  }
  func.func @transform_5(%arg0: i32) -> (i32, i32) {
    %c0_i32 = arith.constant 0 : i32
    %c0_i32_0 = arith.constant 0 : i32
    %c0_i32_1 = arith.constant 0 : i32
    return %c0_i32, %c0_i32_0 : i32, i32
  }
  func.func @transform_6(%arg0: i32) -> (i32, i32) {
    %c0_i32 = arith.constant 0 : i32
    %c0_i32_0 = arith.constant 0 : i32
    %c0_i32_1 = arith.constant 0 : i32
    return %c0_i32, %c0_i32_0 : i32, i32
  }
  func.func @transform_7(%arg0: i32) -> (i32, i32) {
    %c0_i32 = arith.constant 0 : i32
    %c0_i32_0 = arith.constant 0 : i32
    return %c0_i32, %arg0 : i32, i32
  }
}

</mosaic_0001>

<llo_original>
// kernel: tpu_custom_call.1
$region0: #{tpu_custom_call.1}
  #allocation0 [shape = 'u32[]', space=smem, size = 0x4, offset = 0x4, fixed_abs, tag = 'smem constant byte address 0x4 - core index']
  #allocation1 [shape = 'u32[72,128]{1,0:T(1,128)}', space=vmem, size = 0x9000, scoped, tag = 'internal scratch']
  #allocation2 [shape = 'f32[1,1]{1,0:T(1,128)S(1)}', space=vmem, size = 0x200, scoped, tag = 'scoped memory for tpu_custom_call.1']
  %s0 = inlined_call_operand.vmem [shape: f32[16,512], index: 0, kind: input, shape index: {}]
  %s1 = inlined_call_operand.vmem [shape: f32[32,16], index: 1, kind: input, shape index: {}]
  %s2 = inlined_call_operand.vmem [shape: f32[32,1], index: 2, kind: input, shape index: {}]
  %s3 = inlined_call_operand.vmem [shape: f32[32,32], index: 3, kind: input, shape index: {}]
  %s4 = inlined_call_operand.vmem [shape: f32[32,1], index: 4, kind: input, shape index: {}]
  %s5 = inlined_call_operand.vmem [shape: f32[1,32], index: 5, kind: input, shape index: {}]
  %s6 = inlined_call_operand.<no memory space> [shape: f32[1,1], index: 6, kind: input, shape index: {}]
  %s7 = inlined_call_operand.hbm [shape: f32[1,512], index: 7, kind: output, shape index: {}]
  %s8 = sld [smem:[#allocation0]]
  $region84: #{tpu_custom_call.1} parent=0
    _
  %s10 = ssub.s32 1, %s8
  %s11 = scalar_select 0, %s10, %s8
  %v12 = vstv %s6
  %13 = vst [vmem:[#allocation2] sm:$0x1] %v12
  $region1: #{tpu_custom_call.1} parent=0
    #allocation3 [shape = 'u8[32768]{0}', space=vmem, size = 0x8000, scoped, tag = 'input window, operand 0']
    #allocation4 [shape = 'u8[2048]{0}', space=vmem, size = 0x800, scoped, tag = 'output window, operand 0']
    #allocation5 [shape = 's32[2]{0}', space=sflag, size = 0x8, scoped, tag = 'scoped memory for tpu_custom_call.1']
    %14 = vsyncpa [#allocation5], 0
    %s15 = scalar_lea.sflag [#allocation5], 1
    %16 = vsyncpa %s15, 0
    loop: start=0, step=1, limit=4
    $region2: #{tpu_custom_call.1} parent=1 // loop_pre_header
      _
    $region3: #{tpu_custom_call.1} parent=1 // loop_header
      %s18 = sphi 0, %s22
      %p19 = scmp.ge.s32.totalorder %s18, 4
      %s28 = sphi 0, %s30
      %s31 = sphi 0, %s28
      %s32 = sphi 0, %s31
      %s48 = sphi 0, %s32
      %s52 = sphi 0, %s52
      %s54 = sphi 0, %s52
      %s55 = sphi 0, %s54
      %s69 = sphi 0, %s55
      %s73 = sphi 0, %s73
      %s75 = sphi 0, %s73
      %s76 = sphi 0, %s75
      %s90 = sphi 0, %s76
      %s94 = sphi 0, %s94
      %s96 = sphi 0, %s94
      %s97 = sphi 0, %s96
      %s111 = sphi 0, %s97
      %s115 = sphi 0, %s115
      %s117 = sphi 0, %s115
      %s118 = sphi 0, %s117
      %s132 = sphi 0, %s118
      %s136 = sphi 0, %s136
      %s138 = sphi 0, %s136
      %s139 = sphi 0, %s138
      %s153 = sphi 0, %s139
      %s157 = sphi 0, %s157
      %s159 = sphi 0, %s157
      %s160 = sphi 0, %s159
      %s174 = sphi 0, %s160
      %s180 = sphi 0, %s182
      %s183 = sphi 0, %s180
      %s184 = sphi 0, %s183
      %s200 = sphi 0, %s184
    $region4: #{tpu_custom_call.1} parent=1 // loop_header_branch
      %21 = sbr.rel (%p19) target = $region8
    $region5: #{tpu_custom_call.1} parent=1 // loop_body
      %s23 = ssub.s32 %s18, 1
      %s24 = ssub.s32 %s18, 2
      %s25 = sadd.s32 %s18, 1
      %s26 = ssub.s32 %s18, %s25
      %p27 = scmp.eq.s32.totalorder %s26, 0
      %s29 = sadd.s32 %s28, 1
      %s30 = scalar_select %p27, %s28, %s29
      %p33 = pneg %p27
      %p34 = scmp.eq.s32.totalorder %s18, 1
      %p35 = por %p33, %p34
      %p36 = scmp.ne.s32.totalorder %s28, %s31
      %p37 = scmp.eq.s32.totalorder %s18, 0
      %p38 = por %p36, %p37
      %p39 = scmp.ne.s32.totalorder %s28, %s31
      %p40 = scmp.eq.s32.totalorder %s23, 1
      %p41 = por %p39, %p40
      %p42 = scmp.ne.s32.totalorder %s31, %s32
      %p43 = scmp.eq.s32.totalorder %s23, 0
      %p44 = por %p42, %p43
      %p45 = scmp.ne.s32.totalorder %s31, %s32
      %p46 = scmp.eq.s32.totalorder %s24, 1
      %p47 = por %p45, %p46
      %p49 = scmp.ne.s32.totalorder %s32, %s48
      %p50 = scmp.eq.s32.totalorder %s24, 0
      %p51 = por %p49, %p50
      %s53 = sadd.s32 %s52, 1
      %p56 = scmp.eq.s32.totalorder %s18, 1
      %p57 = scmp.ne.s32.totalorder %s52, %s54
      %p58 = scmp.eq.s32.totalorder %s18, 0
      %p59 = por %p57, %p58
      %p60 = scmp.ne.s32.totalorder %s52, %s54
      %p61 = scmp.eq.s32.totalorder %s23, 1
      %p62 = por %p60, %p61
      %p63 = scmp.ne.s32.totalorder %s54, %s55
      %p64 = scmp.eq.s32.totalorder %s23, 0
      %p65 = por %p63, %p64
      %p66 = scmp.ne.s32.totalorder %s54, %s55
      %p67 = scmp.eq.s32.totalorder %s24, 1
      %p68 = por %p66, %p67
      %p70 = scmp.ne.s32.totalorder %s55, %s69
      %p71 = scmp.eq.s32.totalorder %s24, 0
      %p72 = por %p70, %p71
      %s74 = sadd.s32 %s73, 1
      %p77 = scmp.eq.s32.totalorder %s18, 1
      %p78 = scmp.ne.s32.totalorder %s73, %s75
      %p79 = scmp.eq.s32.totalorder %s18, 0
      %p80 = por %p78, %p79
      %p81 = scmp.ne.s32.totalorder %s73, %s75
      %p82 = scmp.eq.s32.totalorder %s23, 1
      %p83 = por %p81, %p82
      %p84 = scmp.ne.s32.totalorder %s75, %s76
      %p85 = scmp.eq.s32.totalorder %s23, 0
      %p86 = por %p84, %p85
      %p87 = scmp.ne.s32.totalorder %s75, %s76
      %p88 = scmp.eq.s32.totalorder %s24, 1
      %p89 = por %p87, %p88
      %p91 = scmp.ne.s32.totalorder %s76, %s90
      %p92 = scmp.eq.s32.totalorder %s24, 0
      %p93 = por %p91, %p92
      %s95 = sadd.s32 %s94, 1
      %p98 = scmp.eq.s32.totalorder %s18, 1
      %p99 = scmp.ne.s32.totalorder %s94, %s96
      %p100 = scmp.eq.s32.totalorder %s18, 0
      %p101 = por %p99, %p100
      %p102 = scmp.ne.s32.totalorder %s94, %s96
      %p103 = scmp.eq.s32.totalorder %s23, 1
      %p104 = por %p102, %p103
      %p105 = scmp.ne.s32.totalorder %s96, %s97
      %p106 = scmp.eq.s32.totalorder %s23, 0
      %p107 = por %p105, %p106
      %p108 = scmp.ne.s32.totalorder %s96, %s97
      %p109 = scmp.eq.s32.totalorder %s24, 1
      %p110 = por %p108, %p109
      %p112 = scmp.ne.s32.totalorder %s97, %s111
      %p113 = scmp.eq.s32.totalorder %s24, 0
      %p114 = por %p112, %p113
      %s116 = sadd.s32 %s115, 1
      %p119 = scmp.eq.s32.totalorder %s18, 1
      %p120 = scmp.ne.s32.totalorder %s115, %s117
      %p121 = scmp.eq.s32.totalorder %s18, 0
      %p122 = por %p120, %p121
      %p123 = scmp.ne.s32.totalorder %s115, %s117
      %p124 = scmp.eq.s32.totalorder %s23, 1
      %p125 = por %p123, %p124
      %p126 = scmp.ne.s32.totalorder %s117, %s118
      %p127 = scmp.eq.s32.totalorder %s23, 0
      %p128 = por %p126, %p127
      %p129 = scmp.ne.s32.totalorder %s117, %s118
      %p130 = scmp.eq.s32.totalorder %s24, 1
      %p131 = por %p129, %p130
      %p133 = scmp.ne.s32.totalorder %s118, %s132
      %p134 = scmp.eq.s32.totalorder %s24, 0
      %p135 = por %p133, %p134
      %s137 = sadd.s32 %s136, 1
      %p140 = scmp.eq.s32.totalorder %s18, 1
      %p141 = scmp.ne.s32.totalorder %s136, %s138
      %p142 = scmp.eq.s32.totalorder %s18, 0
      %p143 = por %p141, %p142
      %p144 = scmp.ne.s32.totalorder %s136, %s138
      %p145 = scmp.eq.s32.totalorder %s23, 1
      %p146 = por %p144, %p145
      %p147 = scmp.ne.s32.totalorder %s138, %s139
      %p148 = scmp.eq.s32.totalorder %s23, 0
      %p149 = por %p147, %p148
      %p150 = scmp.ne.s32.totalorder %s138, %s139
      %p151 = scmp.eq.s32.totalorder %s24, 1
      %p152 = por %p150, %p151
      %p154 = scmp.ne.s32.totalorder %s139, %s153
      %p155 = scmp.eq.s32.totalorder %s24, 0
      %p156 = por %p154, %p155
      %s158 = sadd.s32 %s157, 1
      %p161 = scmp.eq.s32.totalorder %s18, 1
      %p162 = scmp.ne.s32.totalorder %s157, %s159
      %p163 = scmp.eq.s32.totalorder %s18, 0
      %p164 = por %p162, %p163
      %p165 = scmp.ne.s32.totalorder %s157, %s159
      %p166 = scmp.eq.s32.totalorder %s23, 1
      %p167 = por %p165, %p166
      %p168 = scmp.ne.s32.totalorder %s159, %s160
      %p169 = scmp.eq.s32.totalorder %s23, 0
      %p170 = por %p168, %p169
      %p171 = scmp.ne.s32.totalorder %s159, %s160
      %p172 = scmp.eq.s32.totalorder %s24, 1
      %p173 = por %p171, %p172
      %p175 = scmp.ne.s32.totalorder %s160, %s174
      %p176 = scmp.eq.s32.totalorder %s24, 0
      %p177 = por %p175, %p176
      %s178 = ssub.s32 %s18, %s25
      %p179 = scmp.eq.s32.totalorder %s178, 0
      %s181 = sadd.s32 %s180, 1
      %s182 = scalar_select %p179, %s180, %s181
      %p185 = pneg %p179
      %p186 = scmp.eq.s32.totalorder %s18, 1
      %p187 = por %p185, %p186
      %p188 = scmp.ne.s32.totalorder %s180, %s183
      %p189 = scmp.eq.s32.totalorder %s18, 0
      %p190 = por %p188, %p189
      %p191 = scmp.ne.s32.totalorder %s180, %s183
      %p192 = scmp.eq.s32.totalorder %s23, 1
      %p193 = por %p191, %p192
      %p194 = scmp.ne.s32.totalorder %s183, %s184
      %p195 = scmp.eq.s32.totalorder %s23, 0
      %p196 = por %p194, %p195
      %p197 = scmp.ne.s32.totalorder %s183, %s184
      %p198 = scmp.eq.s32.totalorder %s24, 1
      %p199 = por %p197, %p198
      %p201 = scmp.ne.s32.totalorder %s184, %s200
      %p202 = scmp.eq.s32.totalorder %s24, 0
      %p203 = por %p201, %p202
      %p204 = scmp.le.s32.totalorder 1, %s18
      %p205 = scmp.lt.s32.totalorder %s18, 3
      %p206 = pnand %p204, %p205
      %p207 = pneg %p206
      // Predicated region
      $region9: #{tpu_custom_call.1} parent=5 // pred_check
        _
      $region10: #{tpu_custom_call.1} parent=5 // pred_check_branch
        %209 = sbr.rel (%p206) target = $region12
      $region11: #{tpu_custom_call.1} parent=5 // pred_region
        %s210 = ssub.s32 %s18, 1
        // Predicated region
        $region13: #{tpu_custom_call.1} parent=11 // pred_check
          %p211 = pneg %p65
        $region14: #{tpu_custom_call.1} parent=11 // pred_check_branch
          %213 = sbr.rel (%p211) target = $region16
        $region15: #{tpu_custom_call.1} parent=11 // pred_region
          _
        $region16: #{tpu_custom_call.1} parent=11 // pred_fallthru
          _
        // Predicated region
        $region17: #{tpu_custom_call.1} parent=11 // pred_check
          %p214 = pneg %p86
        $region18: #{tpu_custom_call.1} parent=11 // pred_check_branch
          %216 = sbr.rel (%p214) target = $region20
        $region19: #{tpu_custom_call.1} parent=11 // pred_region
          _
        $region20: #{tpu_custom_call.1} parent=11 // pred_fallthru
          _
        // Predicated region
        $region21: #{tpu_custom_call.1} parent=11 // pred_check
          %p217 = pneg %p107
        $region22: #{tpu_custom_call.1} parent=11 // pred_check_branch
          %219 = sbr.rel (%p217) target = $region24
        $region23: #{tpu_custom_call.1} parent=11 // pred_region
          _
        $region24: #{tpu_custom_call.1} parent=11 // pred_fallthru
          _
        // Predicated region
        $region25: #{tpu_custom_call.1} parent=11 // pred_check
          %p220 = pneg %p128
        $region26: #{tpu_custom_call.1} parent=11 // pred_check_branch
          %222 = sbr.rel (%p220) target = $region28
        $region27: #{tpu_custom_call.1} parent=11 // pred_region
          _
        $region28: #{tpu_custom_call.1} parent=11 // pred_fallthru
          _
        // Predicated region
        $region29: #{tpu_custom_call.1} parent=11 // pred_check
          %p223 = pneg %p149
        $region30: #{tpu_custom_call.1} parent=11 // pred_check_branch
          %225 = sbr.rel (%p223) target = $region32
        $region31: #{tpu_custom_call.1} parent=11 // pred_region
          _
        $region32: #{tpu_custom_call.1} parent=11 // pred_fallthru
          _
        // Predicated region
        $region33: #{tpu_custom_call.1} parent=11 // pred_check
          %p226 = pneg %p170
        $region34: #{tpu_custom_call.1} parent=11 // pred_check_branch
          %228 = sbr.rel (%p226) target = $region36
        $region35: #{tpu_custom_call.1} parent=11 // pred_region
          _
        $region36: #{tpu_custom_call.1} parent=11 // pred_fallthru
          _
      $region12: #{tpu_custom_call.1} parent=5 // pred_fallthru
        _
      %p229 = scmp.lt.s32.totalorder %s18, 2
      // Predicated region
      $region37: #{tpu_custom_call.1} parent=5 // pred_check
        %p230 = pneg %p229
      $region38: #{tpu_custom_call.1} parent=5 // pred_check_branch
        %232 = sbr.rel (%p230) target = $region40
      $region39: #{tpu_custom_call.1} parent=5 // pred_region
        // Predicated region
        $region41: #{tpu_custom_call.1} parent=39 // pred_check
          %p233 = pneg %p38
        $region42: #{tpu_custom_call.1} parent=39 // pred_check_branch
          %235 = sbr.rel (%p233) target = $region44
        $region43: #{tpu_custom_call.1} parent=39 // pred_region
          %s236 = sand.u32 %s28, 1
          %s237 = sand.u32 %s28, 1
          %s238 = smul.addr %s237, 32
          %s239 = scalar_lea.vmem [#allocation3], %s238
          %s240 = smul.u32 2, %s18
          %s241 = smul.addr %s240, 8
          %s242 = scalar_lea.vmem %s0, %s241
          // Predicated region
          $region45: #{tpu_custom_call.1} parent=43 // pred_check
            _
          $region46: #{tpu_custom_call.1} parent=43 // pred_check_branch
            %244 = sbr.rel (0) target = $region48
          $region47: #{tpu_custom_call.1} parent=43 // pred_region
            // Predicated region
            $region49: #{tpu_custom_call.1} parent=47 // pred_check
              _
            $region50: #{tpu_custom_call.1} parent=47 // pred_check_branch
              %246 = sbr.rel (0) target = $region52
            $region51: #{tpu_custom_call.1} parent=47 // pred_region
              loop: start=0, step=1, limit=1
              $region53: #{tpu_custom_call.1} parent=51 // loop_pre_header
                _
              $region54: #{tpu_custom_call.1} parent=51 // loop_header
                %s248 = sphi 0, %s252
                %p249 = scmp.ge.s32.totalorder %s248, 1
                %s253 = sphi %s242, %s242
                %s254 = sphi %s239, %s239
              $region55: #{tpu_custom_call.1} parent=51 // loop_header_branch
                %251 = sbr.rel (%p249) target = $region59
              $region56: #{tpu_custom_call.1} parent=51 // loop_body
                %v255 = vld [vmem:[%s253] sm:$0xff]
                %256 = vst [vmem:[%s254] sm:$0xff] %v255
                %v257 = vld [vmem:[%s253 + $0x8] sm:$0xff]
                %258 = vst [vmem:[%s254 + $0x8] sm:$0xff] %v257
                %v259 = vld [vmem:[%s253 + $0x20] sm:$0xff]
                %260 = vst [vmem:[%s254 + $0x10] sm:$0xff] %v259
                %v261 = vld [vmem:[%s253 + $0x28] sm:$0xff]
                %262 = vst [vmem:[%s254 + $0x18] sm:$0xff] %v261
              $region57: #{tpu_custom_call.1} parent=51 // loop_footer
                %s252 = sadd.s32 1, %s248
              $region58: #{tpu_custom_call.1} parent=51 // loop_footer_branch
                %247 = sbr.rel target = $region54
              $region59: #{tpu_custom_call.1} parent=51 // loop_exit
                _
            $region52: #{tpu_custom_call.1} parent=47 // pred_fallthru
              _
            // Predicated region
            $region60: #{tpu_custom_call.1} parent=47 // pred_check
              _
            $region61: #{tpu_custom_call.1} parent=47 // pred_check_branch
              %264 = sbr.rel target = $region63
            $region62: #{tpu_custom_call.1} parent=47 // pred_region
              _
            $region63: #{tpu_custom_call.1} parent=47 // pred_fallthru
              _
          $region48: #{tpu_custom_call.1} parent=43 // pred_fallthru
            _
          %265 = vnop
        $region44: #{tpu_custom_call.1} parent=39 // pred_fallthru
          _
      $region40: #{tpu_custom_call.1} parent=5 // pred_fallthru
        _
      %p266 = scmp.le.s32.totalorder 1, %s18
      %p267 = scmp.lt.s32.totalorder %s18, 3
      %p268 = pnand %p266, %p267
      %p269 = pneg %p268
      // Predicated region
      $region64: #{tpu_custom_call.1} parent=5 // pred_check
        _
      $region65: #{tpu_custom_call.1} parent=5 // pred_check_branch
        %271 = sbr.rel (%p268) target = $region67
      $region66: #{tpu_custom_call.1} parent=5 // pred_region
        %s272 = ssub.s32 %s18, 1
        %s273 = sand.u32 %s31, 1
        %s274 = sand.u32 %s31, 1
        %s275 = smul.addr %s274, 32
        %s276 = scalar_lea.vmem [#allocation3], %s275
        // Predicated region
        $region68: #{tpu_custom_call.1} parent=66 // pred_check
          %p277 = pneg %p44
        $region69: #{tpu_custom_call.1} parent=66 // pred_check_branch
          %279 = sbr.rel (%p277) target = $region71
        $region70: #{tpu_custom_call.1} parent=66 // pred_region
          _
        $region71: #{tpu_custom_call.1} parent=66 // pred_fallthru
          _
        %s280 = sand.u32 %s31, 1
        %s281 = sand.u32 %s31, 1
        %s282 = smul.addr %s281, 32
        %s283 = scalar_lea.vmem [#allocation3], %s282
        %p284 = pneg %p44
        %p285 = pneg %p41
        %p286 = pneg %p65
        %p287 = pneg %p62
        %p288 = pneg %p86
        %p289 = pneg %p83
        %p290 = pneg %p107
        %p291 = pneg %p104
        %p292 = pneg %p128
        %p293 = pneg %p125
        %p294 = pneg %p149
        %p295 = pneg %p146
        %p296 = pneg %p170
        %p297 = pneg %p167
        %p298 = pneg %p196
        %p299 = pneg %p193
        %s300 = sand.u32 %s183, 1
        %s301 = scalar_lea.sflag [#allocation5], %s300
        %s302 = sand.u32 %s183, 1
        %s303 = smul.addr %s302, 2
        %s304 = scalar_lea.vmem [#allocation4], %s303
        %s305 = smul.u32 2, %s23
        %s306 = smul.u32 2, %s23
        %v307 = vld [vmem:[%s1] sm:$0xff]
        %v308 = vld [vmem:[%s1 + $0x8] sm:$0xff]
        %v309 = vld [vmem:[%s1 + $0x10] sm:$0xff]
        %v310 = vld [vmem:[%s1 + $0x18] sm:$0xff]
        %v311 = vld [vmem:[%s276] sm:$0xff]
        %v312 = vld [vmem:[%s276 + $0x8] sm:$0xff]
        %v313 = vld [vmem:[%s276 + $0x10] sm:$0xff]
        %v314 = vld [vmem:[%s276 + $0x18] sm:$0xff]
        %v315 = vld [vmem:[%s2] sm:$0xff]
        %v316 = vld [vmem:[%s2 + $0x8] sm:$0xff]
        %v317 = vld [vmem:[%s2 + $0x10] sm:$0xff]
        %v318 = vld [vmem:[%s2 + $0x18] sm:$0xff]
        %320 = vset.pattern.permute.xlu0 0
        %321 = vperm.xlu0 %320, %v315
        %v322 = vpop.permute.xlu0 %321
        %325 = vset.pattern.permute.xlu0 0
        %326 = vperm.xlu0 %325, %v316
        %v327 = vpop.permute.xlu0 %326
        %330 = vset.pattern.permute.xlu0 0
        %331 = vperm.xlu0 %330, %v317
        %v332 = vpop.permute.xlu0 %331
        %335 = vset.pattern.permute.xlu0 0
        %336 = vperm.xlu0 %335, %v318
        %v337 = vpop.permute.xlu0 %336
        %vm339 = vcmask 130048
        %v341 = vsel %vm339, %v307, 0
        %v344 = vsel %vm339, %v308, 0
        %v347 = vsel %vm339, %v309, 0
        %v350 = vsel %vm339, %v310, 0
        %352 = vmatpush.msra.mxu0 0.0
        %353 = vmatpush.msra.mxu0 0.0
        %354 = vmatpush.msra.mxu0 0.0
        %355 = vmatpush.msra.mxu0 0.0
        %356 = vmatpush.msra.mxu0 0.0
        %357 = vmatpush.msra.mxu0 0.0
        %358 = vmatpush.msra.mxu0 0.0
        %359 = vmatpush.msra.mxu0 0.0
        %360 = vmatpush.msra.mxu0 0.0
        %361 = vmatpush.msra.mxu0 0.0
        %362 = vmatpush.msra.mxu0 0.0
        %363 = vmatpush.msra.mxu0 0.0
        %364 = vmatpush.msra.mxu0 0.0
        %365 = vmatpush.msra.mxu0 0.0
        %366 = vmatpush.msra.mxu0 %v313
        %367 = vmatpush.msra.mxu0 %v311
        %368 = vmatmul.f32.gmra.mxu0 %v341
        %v369 = vpop.f32.mrf.mxu0
        %v370 = vadd.f32 %v322, %v369
        %371 = vmatmul.f32.gmra.mxu0 %v344
        %v372 = vpop.f32.mrf.mxu0
        %v373 = vadd.f32 %v327, %v372
        %374 = vmatmul.f32.gmra.mxu0 %v347
        %v375 = vpop.f32.mrf.mxu0
        %v376 = vadd.f32 %v332, %v375
        %377 = vmatmul.f32.gmra.mxu0 %v350
        %v378 = vpop.f32.mrf.mxu0
        %v379 = vadd.f32 %v337, %v378
        %380 = vdwg.mxu0
        %381 = vmatpush.msra.mxu0 0.0
        %382 = vmatpush.msra.mxu0 0.0
        %383 = vmatpush.msra.mxu0 0.0
        %384 = vmatpush.msra.mxu0 0.0
        %385 = vmatpush.msra.mxu0 0.0
        %386 = vmatpush.msra.mxu0 0.0
        %387 = vmatpush.msra.mxu0 0.0
        %388 = vmatpush.msra.mxu0 0.0
        %389 = vmatpush.msra.mxu0 0.0
        %390 = vmatpush.msra.mxu0 0.0
        %391 = vmatpush.msra.mxu0 0.0
        %392 = vmatpush.msra.mxu0 0.0
        %393 = vmatpush.msra.mxu0 0.0
        %394 = vmatpush.msra.mxu0 0.0
        %395 = vmatpush.msra.mxu0 %v314
        %396 = vmatpush.msra.mxu0 %v312
        %397 = vmatmul.f32.gmra.mxu0 %v341
        %v398 = vpop.f32.mrf.mxu0
        %v399 = vadd.f32 %v322, %v398
        %400 = vmatmul.f32.gmra.mxu0 %v344
        %v401 = vpop.f32.mrf.mxu0
        %v402 = vadd.f32 %v327, %v401
        %403 = vmatmul.f32.gmra.mxu0 %v347
        %v404 = vpop.f32.mrf.mxu0
        %v405 = vadd.f32 %v332, %v404
        %406 = vmatmul.f32.gmra.mxu0 %v350
        %v407 = vpop.f32.mrf.mxu0
        %v408 = vadd.f32 %v337, %v407
        %409 = vdwg.mxu0
        %v410 = vld [vmem:[%s3] sm:$0xff]
        %v411 = vld [vmem:[%s3 + $0x8] sm:$0xff]
        %v412 = vld [vmem:[%s3 + $0x10] sm:$0xff]
        %v413 = vld [vmem:[%s3 + $0x18] sm:$0xff]
        %v414 = vld [vmem:[%s4] sm:$0xff]
        %v415 = vld [vmem:[%s4 + $0x8] sm:$0xff]
        %v416 = vld [vmem:[%s4 + $0x10] sm:$0xff]
        %v417 = vld [vmem:[%s4 + $0x18] sm:$0xff]
        %419 = vset.pattern.permute.xlu0 0
        %420 = vperm.xlu0 %419, %v414
        %v421 = vpop.permute.xlu0 %420
        %424 = vset.pattern.permute.xlu0 0
        %425 = vperm.xlu0 %424, %v415
        %v426 = vpop.permute.xlu0 %425
        %429 = vset.pattern.permute.xlu0 0
        %430 = vperm.xlu0 %429, %v416
        %v431 = vpop.permute.xlu0 %430
        %434 = vset.pattern.permute.xlu0 0
        %435 = vperm.xlu0 %434, %v417
        %v436 = vpop.permute.xlu0 %435
        %vm438 = vcmask 261120
        %v440 = vsel %vm438, %v410, 0
        %v443 = vsel %vm438, %v411, 0
        %v446 = vsel %vm438, %v412, 0
        %v449 = vsel %vm438, %v413, 0
        %451 = vmatpush.msra.mxu0 0.0
        %452 = vmatpush.msra.mxu0 0.0
        %453 = vmatpush.msra.mxu0 0.0
        %454 = vmatpush.msra.mxu0 0.0
        %455 = vmatpush.msra.mxu0 0.0
        %456 = vmatpush.msra.mxu0 0.0
        %457 = vmatpush.msra.mxu0 0.0
        %458 = vmatpush.msra.mxu0 0.0
        %459 = vmatpush.msra.mxu0 0.0
        %460 = vmatpush.msra.mxu0 0.0
        %461 = vmatpush.msra.mxu0 0.0
        %462 = vmatpush.msra.mxu0 0.0
        %463 = vmatpush.msra.mxu0 %v379
        %464 = vmatpush.msra.mxu0 %v376
        %465 = vmatpush.msra.mxu0 %v373
        %466 = vmatpush.msra.mxu0 %v370
        %467 = vmatmul.f32.gmra.mxu0 %v440
        %v468 = vpop.f32.mrf.mxu0
        %v469 = vadd.f32 %v421, %v468
        %470 = vmatmul.f32.gmra.mxu0 %v443
        %v471 = vpop.f32.mrf.mxu0
        %v472 = vadd.f32 %v426, %v471
        %473 = vmatmul.f32.gmra.mxu0 %v446
        %v474 = vpop.f32.mrf.mxu0
        %v475 = vadd.f32 %v431, %v474
        %476 = vmatmul.f32.gmra.mxu0 %v449
        %v477 = vpop.f32.mrf.mxu0
        %v478 = vadd.f32 %v436, %v477
        %479 = vdwg.mxu0
        %480 = vmatpush.msra.mxu0 0.0
        %481 = vmatpush.msra.mxu0 0.0
        %482 = vmatpush.msra.mxu0 0.0
        %483 = vmatpush.msra.mxu0 0.0
        %484 = vmatpush.msra.mxu0 0.0
        %485 = vmatpush.msra.mxu0 0.0
        %486 = vmatpush.msra.mxu0 0.0
        %487 = vmatpush.msra.mxu0 0.0
        %488 = vmatpush.msra.mxu0 0.0
        %489 = vmatpush.msra.mxu0 0.0
        %490 = vmatpush.msra.mxu0 0.0
        %491 = vmatpush.msra.mxu0 0.0
        %492 = vmatpush.msra.mxu0 %v408
        %493 = vmatpush.msra.mxu0 %v405
        %494 = vmatpush.msra.mxu0 %v402
        %495 = vmatpush.msra.mxu0 %v399
        %496 = vmatmul.f32.gmra.mxu0 %v440
        %v497 = vpop.f32.mrf.mxu0
        %v498 = vadd.f32 %v421, %v497
        %499 = vmatmul.f32.gmra.mxu0 %v443
        %v500 = vpop.f32.mrf.mxu0
        %v501 = vadd.f32 %v426, %v500
        %502 = vmatmul.f32.gmra.mxu0 %v446
        %v503 = vpop.f32.mrf.mxu0
        %v504 = vadd.f32 %v431, %v503
        %505 = vmatmul.f32.gmra.mxu0 %v449
        %v506 = vpop.f32.mrf.mxu0
        %v507 = vadd.f32 %v436, %v506
        %508 = vdwg.mxu0
        %509 = vmatpush.msra.mxu0 0.0
        %510 = vmatpush.msra.mxu0 0.0
        %511 = vmatpush.msra.mxu0 0.0
        %512 = vmatpush.msra.mxu0 0.0
        %513 = vmatpush.msra.mxu0 0.0
        %514 = vmatpush.msra.mxu0 0.0
        %515 = vmatpush.msra.mxu0 0.0
        %516 = vmatpush.msra.mxu0 0.0
        %517 = vmatpush.msra.mxu0 0.0
        %518 = vmatpush.msra.mxu0 0.0
        %519 = vmatpush.msra.mxu0 0.0
        %520 = vmatpush.msra.mxu0 0.0
        %521 = vmatpush.msra.mxu0 %v478
        %522 = vmatpush.msra.mxu0 %v475
        %523 = vmatpush.msra.mxu0 %v472
        %524 = vmatpush.msra.mxu0 %v469
        %525 = vmatmul.f32.gmra.mxu0 %v440
        %v526 = vpop.f32.mrf.mxu0
        %v527 = vadd.f32 %v421, %v526
        %528 = vmatmul.f32.gmra.mxu0 %v443
        %v529 = vpop.f32.mrf.mxu0
        %v530 = vadd.f32 %v426, %v529
        %531 = vmatmul.f32.gmra.mxu0 %v446
        %v532 = vpop.f32.mrf.mxu0
        %v533 = vadd.f32 %v431, %v532
        %534 = vmatmul.f32.gmra.mxu0 %v449
        %v535 = vpop.f32.mrf.mxu0
        %v536 = vadd.f32 %v436, %v535
        %537 = vdwg.mxu0
        %538 = vmatpush.msra.mxu0 0.0
        %539 = vmatpush.msra.mxu0 0.0
        %540 = vmatpush.msra.mxu0 0.0
        %541 = vmatpush.msra.mxu0 0.0
        %542 = vmatpush.msra.mxu0 0.0
        %543 = vmatpush.msra.mxu0 0.0
        %544 = vmatpush.msra.mxu0 0.0
        %545 = vmatpush.msra.mxu0 0.0
        %546 = vmatpush.msra.mxu0 0.0
        %547 = vmatpush.msra.mxu0 0.0
        %548 = vmatpush.msra.mxu0 0.0
        %549 = vmatpush.msra.mxu0 0.0
        %550 = vmatpush.msra.mxu0 %v507
        %551 = vmatpush.msra.mxu0 %v504
        %552 = vmatpush.msra.mxu0 %v501
        %553 = vmatpush.msra.mxu0 %v498
        %554 = vmatmul.f32.gmra.mxu0 %v440
        %v555 = vpop.f32.mrf.mxu0
        %v556 = vadd.f32 %v421, %v555
        %557 = vmatmul.f32.gmra.mxu0 %v443
        %v558 = vpop.f32.mrf.mxu0
        %v559 = vadd.f32 %v426, %v558
        %560 = vmatmul.f32.gmra.mxu0 %v446
        %v561 = vpop.f32.mrf.mxu0
        %v562 = vadd.f32 %v431, %v561
        %563 = vmatmul.f32.gmra.mxu0 %v449
        %v564 = vpop.f32.mrf.mxu0
        %v565 = vadd.f32 %v436, %v564
        %566 = vdwg.mxu0
        %v567 = vld [vmem:[%s5] sm:$0x1]
        %v568 = vld [vmem:[#allocation2] sm:$0x1]
        %570 = vset.pattern.permute.xlu0 0
        %571 = vperm.xlu0 %570, %v568
        %v572 = vpop.permute.xlu0 %571
        %v574 = vperm.slane %v572, 0
        %v576 = vsel %vm438, %v567, 0
        %578 = vmatpush.msra.mxu0 0.0
        %579 = vmatpush.msra.mxu0 0.0
        %580 = vmatpush.msra.mxu0 0.0
        %581 = vmatpush.msra.mxu0 0.0
        %582 = vmatpush.msra.mxu0 0.0
        %583 = vmatpush.msra.mxu0 0.0
        %584 = vmatpush.msra.mxu0 0.0
        %585 = vmatpush.msra.mxu0 0.0
        %586 = vmatpush.msra.mxu0 0.0
        %587 = vmatpush.msra.mxu0 0.0
        %588 = vmatpush.msra.mxu0 0.0
        %589 = vmatpush.msra.mxu0 0.0
        %590 = vmatpush.msra.mxu0 %v536
        %591 = vmatpush.msra.mxu0 %v533
        %592 = vmatpush.msra.mxu0 %v530
        %593 = vmatpush.msra.mxu0 %v527
        %594 = vmatmul.f32.gmra.mxu0 %v576
        %v595 = vpop.f32.mrf.mxu0
        %v596 = vadd.f32 %v574, %v595
        %597 = vdwg.mxu0
        %598 = vmatpush.msra.mxu0 0.0
        %599 = vmatpush.msra.mxu0 0.0
        %600 = vmatpush.msra.mxu0 0.0
        %601 = vmatpush.msra.mxu0 0.0
        %602 = vmatpush.msra.mxu0 0.0
        %603 = vmatpush.msra.mxu0 0.0
        %604 = vmatpush.msra.mxu0 0.0
        %605 = vmatpush.msra.mxu0 0.0
        %606 = vmatpush.msra.mxu0 0.0
        %607 = vmatpush.msra.mxu0 0.0
        %608 = vmatpush.msra.mxu0 0.0
        %609 = vmatpush.msra.mxu0 0.0
        %610 = vmatpush.msra.mxu0 %v565
        %611 = vmatpush.msra.mxu0 %v562
        %612 = vmatpush.msra.mxu0 %v559
        %613 = vmatpush.msra.mxu0 %v556
        %614 = vmatmul.f32.gmra.mxu0 %v576
        %v615 = vpop.f32.mrf.mxu0
        %v616 = vadd.f32 %v574, %v615
        %617 = vdwg.mxu0
        %v618 = vxor.u32 %v596, 2147483648
        %v619 = vxor.u32 %v616, 2147483648
        %v620 = vmul.f32 %v618, 1.442695
        %v621 = vpow.pop %v620
        %v622 = vmul.f32 %v619, 1.442695
        %v623 = vpow.pop %v622
        %v624 = vadd.f32 %v621, 1.0
        %v625 = vadd.f32 %v623, 1.0
        %v626 = vrcp.pop %v624
        %v627 = vmul.f32 %v624, %v626
        %v628 = vsub.f32 1.0, %v627
        %v629 = vmul.f32 %v626, %v628
        %v630 = vadd.f32 %v626, %v629
        %vm631 = vweird.f32 %v624
        %vm632 = vweird.f32 %v626
        %vm633 = vmor %vm631, %vm632
        %v634 = vsel %vm633, %v626, %v630
        %v635 = vand.u32 2147483647, %v624
        %vm636 = vcmp.eq.f32.partialorder %v635, 8.507059e+37
        %v637 = vand.u32 %v624, 2147483648
        %v638 = vor.u32 1.1754944e-38, %v637
        %v639 = vsel %vm636, %v638, %v634
        %v640 = vmul.f32 1.0, %v639
        %v641 = vrcp.pop %v625
        %v642 = vmul.f32 %v625, %v641
        %v643 = vsub.f32 1.0, %v642
        %v644 = vmul.f32 %v641, %v643
        %v645 = vadd.f32 %v641, %v644
        %vm646 = vweird.f32 %v625
        %vm647 = vweird.f32 %v641
        %vm648 = vmor %vm646, %vm647
        %v649 = vsel %vm648, %v641, %v645
        %v650 = vand.u32 2147483647, %v625
        %vm651 = vcmp.eq.f32.partialorder %v650, 8.507059e+37
        %v652 = vand.u32 %v625, 2147483648
        %v653 = vor.u32 1.1754944e-38, %v652
        %v654 = vsel %vm651, %v653, %v649
        %v655 = vmul.f32 1.0, %v654
        %v658 = vrot.slane %v655, 7
        %vm659 = vcmask 1040384
        %v660 = vsel %vm659, %v640, %v658
        %v662 = vlaneseq
        %vm663 = vcmp.ge.s32.totalorder %v662, 0
        %vm664 = vcmp.lt.s32.totalorder %v662, 256
        %vm665 = vmand %vm663, %vm664
        %666 = vst.msk [vmem:[%s304] sm:$0x3] %vm665, %v660
        %s667 = sand.u32 %s183, 1
        %s668 = scalar_lea.sflag [#allocation5], %s667
        %s669 = sand.u32 %s183, 1
        %s670 = smul.addr %s669, 2
        %s671 = scalar_lea.vmem [#allocation4], %s670
        // Predicated region
        $region72: #{tpu_custom_call.1} parent=66 // pred_check
          %p672 = pneg %p193
        $region73: #{tpu_custom_call.1} parent=66 // pred_check_branch
          %674 = sbr.rel (%p672) target = $region75
        $region74: #{tpu_custom_call.1} parent=66 // pred_region
          %s675 = smul.u32 2, %s23
          %677 = vsyncadd %s668, 0
          %s678 = scalar_lea.hbm %s7, %s675
          %s680 = sshll.u32 %s671, 4
          %s681 = int_to_ptr.vmem [resolvable:$true] %s680
          %s682 = sshll.u32 %s678, 4
          %s683 = int_to_ptr.hbm [resolvable:$true] %s682
          %685 = dma.vmem_to_hbm [thread:$0]  %s681, 32, %s683, %s668
        $region75: #{tpu_custom_call.1} parent=66 // pred_fallthru
          _
      $region67: #{tpu_custom_call.1} parent=5 // pred_fallthru
        _
      %p686 = scmp.le.s32.totalorder 2, %s18
      // Predicated region
      $region76: #{tpu_custom_call.1} parent=5 // pred_check
        %p687 = pneg %p686
      $region77: #{tpu_custom_call.1} parent=5 // pred_check_branch
        %689 = sbr.rel (%p687) target = $region79
      $region78: #{tpu_custom_call.1} parent=5 // pred_region
        %s690 = ssub.s32 %s18, 2
        // Predicated region
        $region80: #{tpu_custom_call.1} parent=78 // pred_check
          %p691 = pneg %p199
        $region81: #{tpu_custom_call.1} parent=78 // pred_check_branch
          %693 = sbr.rel (%p691) target = $region83
        $region82: #{tpu_custom_call.1} parent=78 // pred_region
          %s694 = sand.u32 %s184, 1
          %s695 = scalar_lea.sflag [#allocation5], %s694
          %s696 = sand.u32 %s184, 1
          %s697 = smul.addr %s696, 2
          %s698 = scalar_lea.vmem [#allocation4], %s697
          %700 = dma.done %s695, 32
        $region83: #{tpu_custom_call.1} parent=78 // pred_fallthru
          _
      $region79: #{tpu_custom_call.1} parent=5 // pred_fallthru
        _
    $region6: #{tpu_custom_call.1} parent=1 // loop_footer
      %s22 = sadd.s32 1, %s18
    $region7: #{tpu_custom_call.1} parent=1 // loop_footer_branch
      %17 = sbr.rel target = $region3
    $region8: #{tpu_custom_call.1} parent=1 // loop_exit
      _
    %701 = vsyncpa [#allocation5], 1
    %s702 = scalar_lea.sflag [#allocation5], 1
    %703 = vsyncpa %s702, 1

</llo_original>
